<compile_context>
chip_gen: v5e
topology: v5e:2x2
jax: 0.10.0
libtpu: 0.0.40
codegen_flags: <defaults>
</compile_context>

<pallas_src>
from functools import partial

import jax
import jax.numpy as jnp
from jax.experimental import pallas as pl
from jax.experimental.pallas import tpu as pltpu


# ------------------------------- Pallas kernel -------------------------------
def encoder_kernel(x_ref, c_ref,
                   w_x_ref, w_c_ref, b_in_ref,
                   w_h_ref, b_h_ref,
                   w_head_ref, b_head_ref,
                   out_ref):
    # featurizer.input: x_flat @ w_x + one_hot(c) @ w_c + (b_in + w_d[d]),
    # then dropout(p=0) = identity, then ReLU.
    h = jnp.dot(x_ref[...], w_x_ref[...], preferred_element_type=jnp.float32)

    tb = c_ref.shape[0]
    nc = w_c_ref.shape[0]
    c_oh = (jax.lax.broadcasted_iota(jnp.int32, (tb, nc), 1)
            == c_ref[...]).astype(jnp.float32)
    h = h + jnp.dot(c_oh, w_c_ref[...], preferred_element_type=jnp.float32)
    h = jnp.maximum(h + b_in_ref[...], 0.0)

    # featurizer.hiddens[0] (mlp_depth=3 -> exactly one hidden layer) -> ReLU.
    h = jnp.dot(h, w_h_ref[...], preferred_element_type=jnp.float32)
    h = jnp.maximum(h + b_h_ref[...], 0.0)

    # featurizer.output folded into the fused, lane-padded
    # [linear_means | linear_log_var | 0-pad] head: one matmul, one dense store.
    out_ref[...] = (jnp.dot(h, w_head_ref[...],
                            preferred_element_type=jnp.float32)
                    + b_head_ref[...]).astype(out_ref.dtype)


# -------------------------------- JAX wrapper ---------------------------------
@partial(jax.jit, static_argnames=("num_classes", "num_domains", "latent_size",
                                   "tile_b"))
def encoder_forward(x, c, d, params, num_classes, num_domains, latent_size,
                    tile_b=512):
    """x: (B, C, H, W) f32, c: (B,) int class labels, d: scalar domain index."""
    (w_in, b_in, w_h, b_h, w_out, b_out, w_mu, b_mu, w_lv, b_lv) = params

    B = x.shape[0]
    x_flat = x.reshape(B, -1).astype(jnp.float32)
    feat_dim = x_flat.shape[1]                       # 1024 (tile-aligned)
    mlp_width = w_h.shape[0]

    # Split featurizer.input weight into x / class-one-hot / domain-one-hot parts.
    w_x = w_in[:feat_dim]                            # (1024, W)
    w_c = w_in[feat_dim:feat_dim + num_classes]      # (num_classes, W)
    w_d = w_in[feat_dim + num_classes:]              # (num_domains, W)

    # d is constant across the batch (torch.zeros_like(c) + d) -> fold its
    # one-hot contribution (a single row of w_d) into the input bias.
    d_row = jax.lax.dynamic_slice_in_dim(w_d, jnp.asarray(d, jnp.int32), 1,
                                         axis=0)
    b_in_eff = b_in + d_row                          # (1, W)

    # Fold the activation-free featurizer.output into the two heads, fuse the
    # heads into one matmul, and zero-pad the head width to a multiple of 128
    # so the output store is lane-dense (unmasked vst).  Exact: padded columns
    # are identically zero and are discarded by the slice below.
    head_w = 2 * latent_size
    head_pad = ((head_w + 127) // 128) * 128
    w_heads = jnp.concatenate([w_mu, w_lv], axis=1)  # (W, 2*latent)
    b_heads = jnp.concatenate([b_mu, b_lv], axis=1)  # (1, 2*latent)
    w_head_f = jnp.pad(w_out @ w_heads, ((0, 0), (0, head_pad - head_w)))
    b_head_f = jnp.pad(b_out @ w_heads + b_heads, ((0, 0), (0, head_pad - head_w)))

    c_ids = c.astype(jnp.int32).reshape(B, 1)

    tb = B if B <= tile_b else tile_b
    grid = (pl.cdiv(B, tb),)

    def resident(shape):
        # Weights/biases: same block every grid step -> stay VMEM-resident.
        return pl.BlockSpec(shape, lambda i: (0, 0))

    out = pl.pallas_call(
        encoder_kernel,
        out_shape=jax.ShapeDtypeStruct((B, head_pad), jnp.float32),
        grid_spec=pltpu.PrefetchScalarGridSpec(
            num_scalar_prefetch=0,
            grid=grid,
            in_specs=[
                pl.BlockSpec((tb, feat_dim), lambda i: (i, 0)),   # x_flat
                pl.BlockSpec((tb, 1), lambda i: (i, 0)),          # class ids
                resident(w_x.shape),
                resident(w_c.shape),
                resident(b_in_eff.shape),
                resident(w_h.shape),
                resident(b_h.shape),
                resident((mlp_width, head_pad)),
                resident((1, head_pad)),
            ],
            out_specs=pl.BlockSpec((tb, head_pad), lambda i: (i, 0)),
        ),
        compiler_params=pltpu.CompilerParams(
            dimension_semantics=("parallel",)),
    )(x_flat, c_ids, w_x, w_c, b_in_eff, w_h, b_h, w_head_f, b_head_f)

    return out[:, :latent_size], out[:, latent_size:head_w]


# ------------------------------ Param construction ----------------------------
def make_linear(key, n_in, n_out):
    # Deterministic, roughly PyTorch-like uniform(+-1/sqrt(n_in)) init.
    kw, kb = jax.random.split(key)
    bound = 1.0 / jnp.sqrt(jnp.asarray(n_in, jnp.float32))
    w = jax.random.uniform(kw, (n_in, n_out), jnp.float32, -bound, bound)
    b = jax.random.uniform(kb, (1, n_out), jnp.float32, -bound, bound)
    return w, b


if __name__ == "__main__":
    B = 2
    C, H, W = 4, 16, 16
    num_classes = 4
    num_domains = 3
    mlp_width = 32
    latent_size = 8
    # mlp_depth = 3 -> exactly one hidden layer in the MLP

    in_dim = C * H * W + num_classes + num_domains   # conditional + use_mlp

    key = jax.random.PRNGKey(0)
    k_x, k_c, k0, k1, k2, k3, k4 = jax.random.split(key, 7)

    x = jax.random.normal(k_x, (B, C, H, W), jnp.float32)
    c = jax.random.randint(k_c, (B,), 0, num_classes, jnp.int32)
    d = 1  # domain index (scalar, as in `torch.zeros_like(c) + d`)

    w_in, b_in = make_linear(k0, in_dim, mlp_width)           # featurizer.input
    w_h, b_h = make_linear(k1, mlp_width, mlp_width)          # featurizer.hiddens[0]
    w_out, b_out = make_linear(k2, mlp_width, mlp_width)      # featurizer.output
    w_mu, b_mu = make_linear(k3, mlp_width, latent_size)      # linear_means
    w_lv, b_lv = make_linear(k4, mlp_width, latent_size)      # linear_log_var

    params = (w_in, b_in, w_h, b_h, w_out, b_out, w_mu, b_mu, w_lv, b_lv)

    means, log_vars = encoder_forward(
        x, c, d, params, num_classes, num_domains, latent_size)
    jax.block_until_ready((means, log_vars))

    # Pure-JAX reference for verification (mirrors the PyTorch forward exactly).
    x_flat = x.reshape(B, -1)
    c_oh = jax.nn.one_hot(c, num_classes, dtype=jnp.float32)
    d_oh = jax.nn.one_hot(jnp.zeros_like(c) + d, num_domains, dtype=jnp.float32)
    xc = jnp.concatenate([x_flat, c_oh, d_oh], axis=-1)
    h = jnp.maximum(xc @ w_in + b_in, 0.0)
    h = jnp.maximum(h @ w_h + b_h, 0.0)
    h = h @ w_out + b_out
    ref_means = h @ w_mu + b_mu
    ref_lv = h @ w_lv + b_lv

    assert means.shape == (B, latent_size) and log_vars.shape == (B, latent_size)
    assert jnp.allclose(means, ref_means, atol=1e-4, rtol=1e-4)
    assert jnp.allclose(log_vars, ref_lv, atol=1e-4, rtol=1e-4)
    print("KERNEL_OK")
</pallas_src>

<mosaic_0001>
module attributes {stable_mosaic.version = 11 : i64} {
  func.func @encoder_kernel(%arg0: i32, %arg1: memref<2x1024xf32, #tpu.memory_space<vmem>>, %arg2: memref<2x1xi32, #tpu.memory_space<vmem>>, %arg3: memref<1024x32xf32, #tpu.memory_space<vmem>>, %arg4: memref<4x32xf32, #tpu.memory_space<vmem>>, %arg5: memref<1x32xf32, #tpu.memory_space<vmem>>, %arg6: memref<32x32xf32, #tpu.memory_space<vmem>>, %arg7: memref<1x32xf32, #tpu.memory_space<vmem>>, %arg8: memref<32x128xf32, #tpu.memory_space<vmem>>, %arg9: memref<1x128xf32, #tpu.memory_space<vmem>>, %arg10: memref<2x128xf32, #tpu.memory_space<vmem>>) attributes {dimension_semantics = [#tpu.dimension_semantics<parallel>], iteration_bounds = array<i64: 1>, scalar_prefetch = 0 : i64, scratch_operands = 0 : i64, tpu.core_type = #tpu.core_type<tc>, window_params = [{transform_indices = @transform_0, window_bounds = array<i64: 2, 1024>}, {transform_indices = @transform_1, window_bounds = array<i64: 2, 1>}, {pipeline_mode = #tpu.pipeline_mode<synchronous>, transform_indices = @transform_2, window_bounds = array<i64: 1024, 32>}, {pipeline_mode = #tpu.pipeline_mode<synchronous>, transform_indices = @transform_3, window_bounds = array<i64: 4, 32>}, {pipeline_mode = #tpu.pipeline_mode<synchronous>, transform_indices = @transform_4, window_bounds = array<i64: 1, 32>}, {pipeline_mode = #tpu.pipeline_mode<synchronous>, transform_indices = @transform_5, window_bounds = array<i64: 32, 32>}, {pipeline_mode = #tpu.pipeline_mode<synchronous>, transform_indices = @transform_6, window_bounds = array<i64: 1, 32>}, {pipeline_mode = #tpu.pipeline_mode<synchronous>, transform_indices = @transform_7, window_bounds = array<i64: 32, 128>}, {pipeline_mode = #tpu.pipeline_mode<synchronous>, transform_indices = @transform_8, window_bounds = array<i64: 1, 128>}, {transform_indices = @transform_9, window_bounds = array<i64: 2, 128>}]} {
    %c0 = arith.constant 0 : index
    %c0_0 = arith.constant 0 : index
    %0 = vector.load %arg1[%c0, %c0_0] : memref<2x1024xf32, #tpu.memory_space<vmem>>, vector<2x1024xf32>
    %c0_1 = arith.constant 0 : index
    %c0_2 = arith.constant 0 : index
    %1 = vector.load %arg3[%c0_1, %c0_2] : memref<1024x32xf32, #tpu.memory_space<vmem>>, vector<1024x32xf32>
    %cst = arith.constant dense<0.000000e+00> : vector<2x32xf32>
    %2 = tpu.matmul %0, %1, %cst {dimension_numbers = #tpu.dot_dimension_numbers<[1], [0], [0], [1], [0, 0, 1, 1], [], []>} : vector<2x1024xf32>, vector<1024x32xf32>, vector<2x32xf32> -> vector<2x32xf32>
    %3 = tpu.iota {dimensions = array<i32: 1>} : vector<2x4xi32>
    %c0_3 = arith.constant 0 : index
    %c0_4 = arith.constant 0 : index
    %4 = vector.load %arg2[%c0_3, %c0_4] : memref<2x1xi32, #tpu.memory_space<vmem>>, vector<2x1xi32>
    %5 = vector.broadcast %4 : vector<2x1xi32> to vector<2x4xi32>
    %6 = arith.cmpi eq, %3, %5 : vector<2x4xi32>
    %7 = arith.extui %6 : vector<2x4xi1> to vector<2x4xi32>
    %8 = arith.sitofp %7 : vector<2x4xi32> to vector<2x4xf32>
    %c0_5 = arith.constant 0 : index
    %c0_6 = arith.constant 0 : index
    %9 = vector.load %arg4[%c0_5, %c0_6] : memref<4x32xf32, #tpu.memory_space<vmem>>, vector<4x32xf32>
    %cst_7 = arith.constant dense<0.000000e+00> : vector<2x32xf32>
    %10 = tpu.matmul %8, %9, %cst_7 {dimension_numbers = #tpu.dot_dimension_numbers<[1], [0], [0], [1], [0, 0, 1, 1], [], []>} : vector<2x4xf32>, vector<4x32xf32>, vector<2x32xf32> -> vector<2x32xf32>
    %11 = arith.addf %2, %10 : vector<2x32xf32>
    %c0_8 = arith.constant 0 : index
    %c0_9 = arith.constant 0 : index
    %12 = vector.load %arg5[%c0_8, %c0_9] : memref<1x32xf32, #tpu.memory_space<vmem>>, vector<1x32xf32>
    %13 = vector.broadcast %12 : vector<1x32xf32> to vector<2x32xf32>
    %14 = arith.addf %11, %13 : vector<2x32xf32>
    %cst_10 = arith.constant 0.000000e+00 : f32
    %15 = vector.broadcast %cst_10 : f32 to vector<2x32xf32>
    %16 = arith.maximumf %14, %15 : vector<2x32xf32>
    %c0_11 = arith.constant 0 : index
    %c0_12 = arith.constant 0 : index
    %17 = vector.load %arg6[%c0_11, %c0_12] : memref<32x32xf32, #tpu.memory_space<vmem>>, vector<32x32xf32>
    %cst_13 = arith.constant dense<0.000000e+00> : vector<2x32xf32>
    %18 = tpu.matmul %16, %17, %cst_13 {dimension_numbers = #tpu.dot_dimension_numbers<[1], [0], [0], [1], [0, 0, 1, 1], [], []>} : vector<2x32xf32>, vector<32x32xf32>, vector<2x32xf32> -> vector<2x32xf32>
    %c0_14 = arith.constant 0 : index
    %c0_15 = arith.constant 0 : index
    %19 = vector.load %arg7[%c0_14, %c0_15] : memref<1x32xf32, #tpu.memory_space<vmem>>, vector<1x32xf32>
    %20 = vector.broadcast %19 : vector<1x32xf32> to vector<2x32xf32>
    %21 = arith.addf %18, %20 : vector<2x32xf32>
    %cst_16 = arith.constant 0.000000e+00 : f32
    %22 = vector.broadcast %cst_16 : f32 to vector<2x32xf32>
    %23 = arith.maximumf %21, %22 : vector<2x32xf32>
    %c0_17 = arith.constant 0 : index
    %c0_18 = arith.constant 0 : index
    %24 = vector.load %arg8[%c0_17, %c0_18] : memref<32x128xf32, #tpu.memory_space<vmem>>, vector<32x128xf32>
    %cst_19 = arith.constant dense<0.000000e+00> : vector<2x128xf32>
    %25 = tpu.matmul %23, %24, %cst_19 {dimension_numbers = #tpu.dot_dimension_numbers<[1], [0], [0], [1], [0, 0, 1, 1], [], []>} : vector<2x32xf32>, vector<32x128xf32>, vector<2x128xf32> -> vector<2x128xf32>
    %c0_20 = arith.constant 0 : index
    %c0_21 = arith.constant 0 : index
    %26 = vector.load %arg9[%c0_20, %c0_21] : memref<1x128xf32, #tpu.memory_space<vmem>>, vector<1x128xf32>
    %27 = vector.broadcast %26 : vector<1x128xf32> to vector<2x128xf32>
    %28 = arith.addf %25, %27 : vector<2x128xf32>
    %c0_22 = arith.constant 0 : index
    %c0_23 = arith.constant 0 : index
    %29 = vector.load %arg10[%c0_22, %c0_23] : memref<2x128xf32, #tpu.memory_space<vmem>>, vector<2x128xf32>
    tpu.vector_store %arg10[%c0_22, %c0_23], %28 {strides = array<i32>} : memref<2x128xf32, #tpu.memory_space<vmem>>, vector<2x128xf32>,
    return
  }
  func.func @transform_0(%arg0: i32) -> (i32, i32) {
    %c0_i32 = arith.constant 0 : i32
    %c0_i32_0 = arith.constant 0 : i32
    return %arg0, %c0_i32 : i32, i32
  }
  func.func @transform_1(%arg0: i32) -> (i32, i32) {
    %c0_i32 = arith.constant 0 : i32
    %c0_i32_0 = arith.constant 0 : i32
    return %arg0, %c0_i32 : i32, i32
  }
  func.func @transform_2(%arg0: i32) -> (i32, i32) {
    %c0_i32 = arith.constant 0 : i32
    %c0_i32_0 = arith.constant 0 : i32
    %c0_i32_1 = arith.constant 0 : i32
    return %c0_i32, %c0_i32_0 : i32, i32
  }
  func.func @transform_3(%arg0: i32) -> (i32, i32) {
    %c0_i32 = arith.constant 0 : i32
    %c0_i32_0 = arith.constant 0 : i32
    %c0_i32_1 = arith.constant 0 : i32
    return %c0_i32, %c0_i32_0 : i32, i32
  }
  func.func @transform_4(%arg0: i32) -> (i32, i32) {
    %c0_i32 = arith.constant 0 : i32
    %c0_i32_0 = arith.constant 0 : i32
    %c0_i32_1 = arith.constant 0 : i32
    return %c0_i32, %c0_i32_0 : i32, i32
  }
  func.func @transform_5(%arg0: i32) -> (i32, i32) {
    %c0_i32 = arith.constant 0 : i32
    %c0_i32_0 = arith.constant 0 : i32
    %c0_i32_1 = arith.constant 0 : i32
    return %c0_i32, %c0_i32_0 : i32, i32
  }
  func.func @transform_6(%arg0: i32) -> (i32, i32) {
    %c0_i32 = arith.constant 0 : i32
    %c0_i32_0 = arith.constant 0 : i32
    %c0_i32_1 = arith.constant 0 : i32
    return %c0_i32, %c0_i32_0 : i32, i32
  }
  func.func @transform_7(%arg0: i32) -> (i32, i32) {
    %c0_i32 = arith.constant 0 : i32
    %c0_i32_0 = arith.constant 0 : i32
    %c0_i32_1 = arith.constant 0 : i32
    return %c0_i32, %c0_i32_0 : i32, i32
  }
  func.func @transform_8(%arg0: i32) -> (i32, i32) {
    %c0_i32 = arith.constant 0 : i32
    %c0_i32_0 = arith.constant 0 : i32
    %c0_i32_1 = arith.constant 0 : i32
    return %c0_i32, %c0_i32_0 : i32, i32
  }
  func.func @transform_9(%arg0: i32) -> (i32, i32) {
    %c0_i32 = arith.constant 0 : i32
    %c0_i32_0 = arith.constant 0 : i32
    return %arg0, %c0_i32 : i32, i32
  }
}

</mosaic_0001>

<llo_original>
// kernel: encoder_forward.1
$region0: #{encoder_forward.1}
  #allocation0 [shape = 'u32[]', space=smem, size = 0x4, offset = 0x4, fixed_abs, tag = 'smem constant byte address 0x4 - core index']
  #allocation1 [shape = 'u32[72,128]{1,0:T(1,128)}', space=vmem, size = 0x9000, scoped, tag = 'internal scratch']
  %s0 = inlined_call_operand.vmem [shape: f32[2,1024], index: 0, kind: input, shape index: {}]
  %s1 = inlined_call_operand.vmem [shape: s32[2,1], index: 1, kind: input, shape index: {}]
  %s2 = inlined_call_operand.vmem [shape: f32[1024,32], index: 2, kind: input, shape index: {}]
  %s3 = inlined_call_operand.vmem [shape: f32[4,32], index: 3, kind: input, shape index: {}]
  %s4 = inlined_call_operand.vmem [shape: f32[1,32], index: 4, kind: input, shape index: {}]
  %s5 = inlined_call_operand.vmem [shape: f32[32,32], index: 5, kind: input, shape index: {}]
  %s6 = inlined_call_operand.vmem [shape: f32[1,32], index: 6, kind: input, shape index: {}]
  %s7 = inlined_call_operand.vmem [shape: f32[32,128], index: 7, kind: input, shape index: {}]
  %s8 = inlined_call_operand.vmem [shape: f32[1,128], index: 8, kind: input, shape index: {}]
  %s9 = inlined_call_operand.vmem [shape: f32[2,128], index: 9, kind: output, shape index: {}]
  %s10 = sld [smem:[#allocation0]]
  $region46: #{encoder_forward.1} parent=0
    _
  %s12 = ssub.s32 1, %s10
  %s13 = scalar_select 0, %s12, %s10
  // Predicated region
  $region2: #{encoder_forward.1} parent=0 // pred_check
    _
  $region3: #{encoder_forward.1} parent=0 // pred_check_branch
    %15 = sbr.rel (0) target = $region5
  $region4: #{encoder_forward.1} parent=0 // pred_region
    _
  $region5: #{encoder_forward.1} parent=0 // pred_fallthru
    _
  // Predicated region
  $region6: #{encoder_forward.1} parent=0 // pred_check
    _
  $region7: #{encoder_forward.1} parent=0 // pred_check_branch
    %17 = sbr.rel (0) target = $region9
  $region8: #{encoder_forward.1} parent=0 // pred_region
    _
  $region9: #{encoder_forward.1} parent=0 // pred_fallthru
    _
  // Predicated region
  $region10: #{encoder_forward.1} parent=0 // pred_check
    _
  $region11: #{encoder_forward.1} parent=0 // pred_check_branch
    %19 = sbr.rel (0) target = $region13
  $region12: #{encoder_forward.1} parent=0 // pred_region
    _
  $region13: #{encoder_forward.1} parent=0 // pred_fallthru
    _
  // Predicated region
  $region14: #{encoder_forward.1} parent=0 // pred_check
    _
  $region15: #{encoder_forward.1} parent=0 // pred_check_branch
    %21 = sbr.rel (0) target = $region17
  $region16: #{encoder_forward.1} parent=0 // pred_region
    _
  $region17: #{encoder_forward.1} parent=0 // pred_fallthru
    _
  // Predicated region
  $region18: #{encoder_forward.1} parent=0 // pred_check
    _
  $region19: #{encoder_forward.1} parent=0 // pred_check_branch
    %23 = sbr.rel (0) target = $region21
  $region20: #{encoder_forward.1} parent=0 // pred_region
    _
  $region21: #{encoder_forward.1} parent=0 // pred_fallthru
    _
  // Predicated region
  $region22: #{encoder_forward.1} parent=0 // pred_check
    _
  $region23: #{encoder_forward.1} parent=0 // pred_check_branch
    %25 = sbr.rel (0) target = $region25
  $region24: #{encoder_forward.1} parent=0 // pred_region
    _
  $region25: #{encoder_forward.1} parent=0 // pred_fallthru
    _
  // Predicated region
  $region26: #{encoder_forward.1} parent=0 // pred_check
    _
  $region27: #{encoder_forward.1} parent=0 // pred_check_branch
    %27 = sbr.rel (0) target = $region29
  $region28: #{encoder_forward.1} parent=0 // pred_region
    _
  $region29: #{encoder_forward.1} parent=0 // pred_fallthru
    _
  // Predicated region
  $region30: #{encoder_forward.1} parent=0 // pred_check
    _
  $region31: #{encoder_forward.1} parent=0 // pred_check_branch
    %29 = sbr.rel (0) target = $region33
  $region32: #{encoder_forward.1} parent=0 // pred_region
    _
  $region33: #{encoder_forward.1} parent=0 // pred_fallthru
    _
  // Predicated region
  $region34: #{encoder_forward.1} parent=0 // pred_check
    _
  $region35: #{encoder_forward.1} parent=0 // pred_check_branch
    %31 = sbr.rel (0) target = $region37
  $region36: #{encoder_forward.1} parent=0 // pred_region
    _
  $region37: #{encoder_forward.1} parent=0 // pred_fallthru
    _
  %v32 = vld [vmem:[%s0] sm:$0xff]
  %v33 = vld [vmem:[%s0 + $0x8] sm:$0xff]
  %v34 = vld [vmem:[%s2] sm:$0xff]
  %v35 = vld [vmem:[%s2 + $0x8] sm:$0xff]
  %v36 = vld [vmem:[%s2 + $0x10] sm:$0xff]
  %v37 = vld [vmem:[%s2 + $0x18] sm:$0xff]
  %v38 = vld [vmem:[%s2 + $0x20] sm:$0xff]
  %v39 = vld [vmem:[%s2 + $0x28] sm:$0xff]
  %v40 = vld [vmem:[%s2 + $0x30] sm:$0xff]
  %v41 = vld [vmem:[%s2 + $0x38] sm:$0xff]
  %v42 = vld [vmem:[%s2 + $0x40] sm:$0xff]
  %v43 = vld [vmem:[%s2 + $0x48] sm:$0xff]
  %v44 = vld [vmem:[%s2 + $0x50] sm:$0xff]
  %v45 = vld [vmem:[%s2 + $0x58] sm:$0xff]
  %v46 = vld [vmem:[%s2 + $0x60] sm:$0xff]
  %v47 = vld [vmem:[%s2 + $0x68] sm:$0xff]
  %v48 = vld [vmem:[%s2 + $0x70] sm:$0xff]
  %v49 = vld [vmem:[%s2 + $0x78] sm:$0xff]
  %v50 = vld [vmem:[%s2 + $0x80] sm:$0xff]
  %v51 = vld [vmem:[%s2 + $0x88] sm:$0xff]
  %v52 = vld [vmem:[%s2 + $0x90] sm:$0xff]
  %v53 = vld [vmem:[%s2 + $0x98] sm:$0xff]
  %v54 = vld [vmem:[%s2 + $0xa0] sm:$0xff]
  %v55 = vld [vmem:[%s2 + $0xa8] sm:$0xff]
  %v56 = vld [vmem:[%s2 + $0xb0] sm:$0xff]
  %v57 = vld [vmem:[%s2 + $0xb8] sm:$0xff]
  %v58 = vld [vmem:[%s2 + $0xc0] sm:$0xff]
  %v59 = vld [vmem:[%s2 + $0xc8] sm:$0xff]
  %v60 = vld [vmem:[%s2 + $0xd0] sm:$0xff]
  %v61 = vld [vmem:[%s2 + $0xd8] sm:$0xff]
  %v62 = vld [vmem:[%s2 + $0xe0] sm:$0xff]
  %v63 = vld [vmem:[%s2 + $0xe8] sm:$0xff]
  %v64 = vld [vmem:[%s2 + $0xf0] sm:$0xff]
  %v65 = vld [vmem:[%s2 + $0xf8] sm:$0xff]
  %v66 = vld [vmem:[%s2 + $0x100] sm:$0xff]
  %v67 = vld [vmem:[%s2 + $0x108] sm:$0xff]
  %v68 = vld [vmem:[%s2 + $0x110] sm:$0xff]
  %v69 = vld [vmem:[%s2 + $0x118] sm:$0xff]
  %v70 = vld [vmem:[%s2 + $0x120] sm:$0xff]
  %v71 = vld [vmem:[%s2 + $0x128] sm:$0xff]
  %v72 = vld [vmem:[%s2 + $0x130] sm:$0xff]
  %v73 = vld [vmem:[%s2 + $0x138] sm:$0xff]
  %v74 = vld [vmem:[%s2 + $0x140] sm:$0xff]
  %v75 = vld [vmem:[%s2 + $0x148] sm:$0xff]
  %v76 = vld [vmem:[%s2 + $0x150] sm:$0xff]
  %v77 = vld [vmem:[%s2 + $0x158] sm:$0xff]
  %v78 = vld [vmem:[%s2 + $0x160] sm:$0xff]
  %v79 = vld [vmem:[%s2 + $0x168] sm:$0xff]
  %v80 = vld [vmem:[%s2 + $0x170] sm:$0xff]
  %v81 = vld [vmem:[%s2 + $0x178] sm:$0xff]
  %v82 = vld [vmem:[%s2 + $0x180] sm:$0xff]
  %v83 = vld [vmem:[%s2 + $0x188] sm:$0xff]
  %v84 = vld [vmem:[%s2 + $0x190] sm:$0xff]
  %v85 = vld [vmem:[%s2 + $0x198] sm:$0xff]
  %v86 = vld [vmem:[%s2 + $0x1a0] sm:$0xff]
  %v87 = vld [vmem:[%s2 + $0x1a8] sm:$0xff]
  %v88 = vld [vmem:[%s2 + $0x1b0] sm:$0xff]
  %v89 = vld [vmem:[%s2 + $0x1b8] sm:$0xff]
  %v90 = vld [vmem:[%s2 + $0x1c0] sm:$0xff]
  %v91 = vld [vmem:[%s2 + $0x1c8] sm:$0xff]
  %v92 = vld [vmem:[%s2 + $0x1d0] sm:$0xff]
  %v93 = vld [vmem:[%s2 + $0x1d8] sm:$0xff]
  %v94 = vld [vmem:[%s2 + $0x1e0] sm:$0xff]
  %v95 = vld [vmem:[%s2 + $0x1e8] sm:$0xff]
  %v96 = vld [vmem:[%s2 + $0x1f0] sm:$0xff]
  %v97 = vld [vmem:[%s2 + $0x1f8] sm:$0xff]
  %v98 = vld [vmem:[%s2 + $0x200] sm:$0xff]
  %v99 = vld [vmem:[%s2 + $0x208] sm:$0xff]
  %v100 = vld [vmem:[%s2 + $0x210] sm:$0xff]
  %v101 = vld [vmem:[%s2 + $0x218] sm:$0xff]
  %v102 = vld [vmem:[%s2 + $0x220] sm:$0xff]
  %v103 = vld [vmem:[%s2 + $0x228] sm:$0xff]
  %v104 = vld [vmem:[%s2 + $0x230] sm:$0xff]
  %v105 = vld [vmem:[%s2 + $0x238] sm:$0xff]
  %v106 = vld [vmem:[%s2 + $0x240] sm:$0xff]
  %v107 = vld [vmem:[%s2 + $0x248] sm:$0xff]
  %v108 = vld [vmem:[%s2 + $0x250] sm:$0xff]
  %v109 = vld [vmem:[%s2 + $0x258] sm:$0xff]
  %v110 = vld [vmem:[%s2 + $0x260] sm:$0xff]
  %v111 = vld [vmem:[%s2 + $0x268] sm:$0xff]
  %v112 = vld [vmem:[%s2 + $0x270] sm:$0xff]
  %v113 = vld [vmem:[%s2 + $0x278] sm:$0xff]
  %v114 = vld [vmem:[%s2 + $0x280] sm:$0xff]
  %v115 = vld [vmem:[%s2 + $0x288] sm:$0xff]
  %v116 = vld [vmem:[%s2 + $0x290] sm:$0xff]
  %v117 = vld [vmem:[%s2 + $0x298] sm:$0xff]
  %v118 = vld [vmem:[%s2 + $0x2a0] sm:$0xff]
  %v119 = vld [vmem:[%s2 + $0x2a8] sm:$0xff]
  %v120 = vld [vmem:[%s2 + $0x2b0] sm:$0xff]
  %v121 = vld [vmem:[%s2 + $0x2b8] sm:$0xff]
  %v122 = vld [vmem:[%s2 + $0x2c0] sm:$0xff]
  %v123 = vld [vmem:[%s2 + $0x2c8] sm:$0xff]
  %v124 = vld [vmem:[%s2 + $0x2d0] sm:$0xff]
  %v125 = vld [vmem:[%s2 + $0x2d8] sm:$0xff]
  %v126 = vld [vmem:[%s2 + $0x2e0] sm:$0xff]
  %v127 = vld [vmem:[%s2 + $0x2e8] sm:$0xff]
  %v128 = vld [vmem:[%s2 + $0x2f0] sm:$0xff]
  %v129 = vld [vmem:[%s2 + $0x2f8] sm:$0xff]
  %v130 = vld [vmem:[%s2 + $0x300] sm:$0xff]
  %v131 = vld [vmem:[%s2 + $0x308] sm:$0xff]
  %v132 = vld [vmem:[%s2 + $0x310] sm:$0xff]
  %v133 = vld [vmem:[%s2 + $0x318] sm:$0xff]
  %v134 = vld [vmem:[%s2 + $0x320] sm:$0xff]
  %v135 = vld [vmem:[%s2 + $0x328] sm:$0xff]
  %v136 = vld [vmem:[%s2 + $0x330] sm:$0xff]
  %v137 = vld [vmem:[%s2 + $0x338] sm:$0xff]
  %v138 = vld [vmem:[%s2 + $0x340] sm:$0xff]
  %v139 = vld [vmem:[%s2 + $0x348] sm:$0xff]
  %v140 = vld [vmem:[%s2 + $0x350] sm:$0xff]
  %v141 = vld [vmem:[%s2 + $0x358] sm:$0xff]
  %v142 = vld [vmem:[%s2 + $0x360] sm:$0xff]
  %v143 = vld [vmem:[%s2 + $0x368] sm:$0xff]
  %v144 = vld [vmem:[%s2 + $0x370] sm:$0xff]
  %v145 = vld [vmem:[%s2 + $0x378] sm:$0xff]
  %v146 = vld [vmem:[%s2 + $0x380] sm:$0xff]
  %v147 = vld [vmem:[%s2 + $0x388] sm:$0xff]
  %v148 = vld [vmem:[%s2 + $0x390] sm:$0xff]
  %v149 = vld [vmem:[%s2 + $0x398] sm:$0xff]
  %v150 = vld [vmem:[%s2 + $0x3a0] sm:$0xff]
  %v151 = vld [vmem:[%s2 + $0x3a8] sm:$0xff]
  %v152 = vld [vmem:[%s2 + $0x3b0] sm:$0xff]
  %v153 = vld [vmem:[%s2 + $0x3b8] sm:$0xff]
  %v154 = vld [vmem:[%s2 + $0x3c0] sm:$0xff]
  %v155 = vld [vmem:[%s2 + $0x3c8] sm:$0xff]
  %v156 = vld [vmem:[%s2 + $0x3d0] sm:$0xff]
  %v157 = vld [vmem:[%s2 + $0x3d8] sm:$0xff]
  %v158 = vld [vmem:[%s2 + $0x3e0] sm:$0xff]
  %v159 = vld [vmem:[%s2 + $0x3e8] sm:$0xff]
  %v160 = vld [vmem:[%s2 + $0x3f0] sm:$0xff]
  %v161 = vld [vmem:[%s2 + $0x3f8] sm:$0xff]
  %v162 = vlaneseq
  %v163 = vand.u32 %v162, 127
  %v164 = vld [vmem:[%s1] sm:$0x3]
  %165 = vset.pattern.permute.xlu0 0
  %166 = vperm.xlu0 %165, %v164
  %v167 = vpop.permute.xlu0 %166
  %vm168 = vcmp.eq.s32.totalorder %v163, %v167
  %v169 = vsel %vm168, 1, 0
  %v170 = vcvt.s32.f32 %v169
  %v171 = vld [vmem:[%s3] sm:$0xf]
  %vm172 = vcmask 31744
  %v174 = vsel %vm172, %v170, 0
  %vm176 = vcmask 1043456
  %v178 = vsel %vm176, %v171, 0
  %180 = vmatpush.msra.mxu0 0.0
  %181 = vmatpush.msra.mxu0 0.0
  %182 = vmatpush.msra.mxu0 0.0
  %183 = vmatpush.msra.mxu0 0.0
  %184 = vmatpush.msra.mxu0 0.0
  %185 = vmatpush.msra.mxu0 0.0
  %186 = vmatpush.msra.mxu0 0.0
  %187 = vmatpush.msra.mxu0 0.0
  %188 = vmatpush.msra.mxu0 0.0
  %189 = vmatpush.msra.mxu0 0.0
  %190 = vmatpush.msra.mxu0 0.0
  %191 = vmatpush.msra.mxu0 0.0
  %192 = vmatpush.msra.mxu0 0.0
  %193 = vmatpush.msra.mxu0 0.0
  %194 = vmatpush.msra.mxu0 0.0
  %195 = vmatpush.msra.mxu0 %v178
  %196 = vmatmul.f32.gmra.mxu0 %v174
  %v197 = vpop.f32.mrf.mxu0
  %v198 = vadd.f32 0.0, %v197
  %199 = vdwg.mxu0
  %202 = vst [vmem:[#allocation1] ss:$4 sm:$0xff] %v32
  %s203 = scalar_lea.vmem [#allocation1], 32
  %204 = vst [vmem:[%s203] ss:$4 sm:$0xff] %v33
  %v205 = vld.sshfl [vmem:[#allocation1] sm:$0xff pattern:$0x73625140]
  %v206 = vld.sshfl [vmem:[#allocation1 + $0x8] sm:$0xff pattern:$0x73625140]
  %v207 = vld.sshfl [vmem:[#allocation1 + $0x10] sm:$0xff pattern:$0x73625140]
  %v208 = vld.sshfl [vmem:[#allocation1 + $0x18] sm:$0xff pattern:$0x73625140]
  %v209 = vld.sshfl [vmem:[#allocation1 + $0x20] sm:$0xff pattern:$0x73625140]
  %v210 = vld.sshfl [vmem:[#allocation1 + $0x28] sm:$0xff pattern:$0x73625140]
  %v211 = vld.sshfl [vmem:[#allocation1 + $0x30] sm:$0xff pattern:$0x73625140]
  %v212 = vld.sshfl [vmem:[#allocation1 + $0x38] sm:$0xff pattern:$0x73625140]
  %221 = vmatpush.msra.mxu0 %v49
  %222 = vmatpush.msra.mxu0 %v48
  %223 = vmatpush.msra.mxu0 %v47
  %224 = vmatpush.msra.mxu0 %v46
  %225 = vmatpush.msra.mxu0 %v45
  %226 = vmatpush.msra.mxu0 %v44
  %227 = vmatpush.msra.mxu0 %v43
  %228 = vmatpush.msra.mxu0 %v42
  %229 = vmatpush.msra.mxu0 %v41
  %230 = vmatpush.msra.mxu0 %v40
  %231 = vmatpush.msra.mxu0 %v39
  %232 = vmatpush.msra.mxu0 %v38
  %233 = vmatpush.msra.mxu0 %v37
  %234 = vmatpush.msra.mxu0 %v36
  %235 = vmatpush.msra.mxu0 %v35
  %236 = vmatpush.msra.mxu0 %v34
  %237 = vmatmul.f32.gmra.mxu0 %v205
  %v238 = vpop.f32.mrf.mxu0
  %v239 = vadd.f32 %v198, %v238
  %240 = vdwg.mxu0
  %241 = vmatpush.msra.mxu0 %v65
  %242 = vmatpush.msra.mxu0 %v64
  %243 = vmatpush.msra.mxu0 %v63
  %244 = vmatpush.msra.mxu0 %v62
  %245 = vmatpush.msra.mxu0 %v61
  %246 = vmatpush.msra.mxu0 %v60
  %247 = vmatpush.msra.mxu0 %v59
  %248 = vmatpush.msra.mxu0 %v58
  %249 = vmatpush.msra.mxu0 %v57
  %250 = vmatpush.msra.mxu0 %v56
  %251 = vmatpush.msra.mxu0 %v55
  %252 = vmatpush.msra.mxu0 %v54
  %253 = vmatpush.msra.mxu0 %v53
  %254 = vmatpush.msra.mxu0 %v52
  %255 = vmatpush.msra.mxu0 %v51
  %256 = vmatpush.msra.mxu0 %v50
  %257 = vmatmul.f32.gmra.mxu0 %v206
  %v258 = vpop.f32.mrf.mxu0
  %v259 = vadd.f32 %v239, %v258
  %260 = vdwg.mxu0
  %261 = vmatpush.msra.mxu0 %v81
  %262 = vmatpush.msra.mxu0 %v80
  %263 = vmatpush.msra.mxu0 %v79
  %264 = vmatpush.msra.mxu0 %v78
  %265 = vmatpush.msra.mxu0 %v77
  %266 = vmatpush.msra.mxu0 %v76
  %267 = vmatpush.msra.mxu0 %v75
  %268 = vmatpush.msra.mxu0 %v74
  %269 = vmatpush.msra.mxu0 %v73
  %270 = vmatpush.msra.mxu0 %v72
  %271 = vmatpush.msra.mxu0 %v71
  %272 = vmatpush.msra.mxu0 %v70
  %273 = vmatpush.msra.mxu0 %v69
  %274 = vmatpush.msra.mxu0 %v68
  %275 = vmatpush.msra.mxu0 %v67
  %276 = vmatpush.msra.mxu0 %v66
  %277 = vmatmul.f32.gmra.mxu0 %v207
  %v278 = vpop.f32.mrf.mxu0
  %v279 = vadd.f32 %v259, %v278
  %280 = vdwg.mxu0
  %281 = vmatpush.msra.mxu0 %v97
  %282 = vmatpush.msra.mxu0 %v96
  %283 = vmatpush.msra.mxu0 %v95
  %284 = vmatpush.msra.mxu0 %v94
  %285 = vmatpush.msra.mxu0 %v93
  %286 = vmatpush.msra.mxu0 %v92
  %287 = vmatpush.msra.mxu0 %v91
  %288 = vmatpush.msra.mxu0 %v90
  %289 = vmatpush.msra.mxu0 %v89
  %290 = vmatpush.msra.mxu0 %v88
  %291 = vmatpush.msra.mxu0 %v87
  %292 = vmatpush.msra.mxu0 %v86
  %293 = vmatpush.msra.mxu0 %v85
  %294 = vmatpush.msra.mxu0 %v84
  %295 = vmatpush.msra.mxu0 %v83
  %296 = vmatpush.msra.mxu0 %v82
  %297 = vmatmul.f32.gmra.mxu0 %v208
  %v298 = vpop.f32.mrf.mxu0
  %v299 = vadd.f32 %v279, %v298
  %300 = vdwg.mxu0
  %301 = vmatpush.msra.mxu0 %v113
  %302 = vmatpush.msra.mxu0 %v112
  %303 = vmatpush.msra.mxu0 %v111
  %304 = vmatpush.msra.mxu0 %v110
  %305 = vmatpush.msra.mxu0 %v109
  %306 = vmatpush.msra.mxu0 %v108
  %307 = vmatpush.msra.mxu0 %v107
  %308 = vmatpush.msra.mxu0 %v106
  %309 = vmatpush.msra.mxu0 %v105
  %310 = vmatpush.msra.mxu0 %v104
  %311 = vmatpush.msra.mxu0 %v103
  %312 = vmatpush.msra.mxu0 %v102
  %313 = vmatpush.msra.mxu0 %v101
  %314 = vmatpush.msra.mxu0 %v100
  %315 = vmatpush.msra.mxu0 %v99
  %316 = vmatpush.msra.mxu0 %v98
  %317 = vmatmul.f32.gmra.mxu0 %v209
  %v318 = vpop.f32.mrf.mxu0
  %v319 = vadd.f32 %v299, %v318
  %320 = vdwg.mxu0
  %321 = vmatpush.msra.mxu0 %v129
  %322 = vmatpush.msra.mxu0 %v128
  %323 = vmatpush.msra.mxu0 %v127
  %324 = vmatpush.msra.mxu0 %v126
  %325 = vmatpush.msra.mxu0 %v125
  %326 = vmatpush.msra.mxu0 %v124
  %327 = vmatpush.msra.mxu0 %v123
  %328 = vmatpush.msra.mxu0 %v122
  %329 = vmatpush.msra.mxu0 %v121
  %330 = vmatpush.msra.mxu0 %v120
  %331 = vmatpush.msra.mxu0 %v119
  %332 = vmatpush.msra.mxu0 %v118
  %333 = vmatpush.msra.mxu0 %v117
  %334 = vmatpush.msra.mxu0 %v116
  %335 = vmatpush.msra.mxu0 %v115
  %336 = vmatpush.msra.mxu0 %v114
  %337 = vmatmul.f32.gmra.mxu0 %v210
  %v338 = vpop.f32.mrf.mxu0
  %v339 = vadd.f32 %v319, %v338
  %340 = vdwg.mxu0
  %341 = vmatpush.msra.mxu0 %v145
  %342 = vmatpush.msra.mxu0 %v144
  %343 = vmatpush.msra.mxu0 %v143
  %344 = vmatpush.msra.mxu0 %v142
  %345 = vmatpush.msra.mxu0 %v141
  %346 = vmatpush.msra.mxu0 %v140
  %347 = vmatpush.msra.mxu0 %v139
  %348 = vmatpush.msra.mxu0 %v138
  %349 = vmatpush.msra.mxu0 %v137
  %350 = vmatpush.msra.mxu0 %v136
  %351 = vmatpush.msra.mxu0 %v135
  %352 = vmatpush.msra.mxu0 %v134
  %353 = vmatpush.msra.mxu0 %v133
  %354 = vmatpush.msra.mxu0 %v132
  %355 = vmatpush.msra.mxu0 %v131
  %356 = vmatpush.msra.mxu0 %v130
  %357 = vmatmul.f32.gmra.mxu0 %v211
  %v358 = vpop.f32.mrf.mxu0
  %v359 = vadd.f32 %v339, %v358
  %360 = vdwg.mxu0
  %361 = vmatpush.msra.mxu0 %v161
  %362 = vmatpush.msra.mxu0 %v160
  %363 = vmatpush.msra.mxu0 %v159
  %364 = vmatpush.msra.mxu0 %v158
  %365 = vmatpush.msra.mxu0 %v157
  %366 = vmatpush.msra.mxu0 %v156
  %367 = vmatpush.msra.mxu0 %v155
  %368 = vmatpush.msra.mxu0 %v154
  %369 = vmatpush.msra.mxu0 %v153
  %370 = vmatpush.msra.mxu0 %v152
  %371 = vmatpush.msra.mxu0 %v151
  %372 = vmatpush.msra.mxu0 %v150
  %373 = vmatpush.msra.mxu0 %v149
  %374 = vmatpush.msra.mxu0 %v148
  %375 = vmatpush.msra.mxu0 %v147
  %376 = vmatpush.msra.mxu0 %v146
  %377 = vmatmul.f32.gmra.mxu0 %v212
  %v378 = vpop.f32.mrf.mxu0
  %v379 = vadd.f32 %v359, %v378
  %380 = vdwg.mxu0
  %v381 = vld [vmem:[%s4] sm:$0x1]
  %v383 = vperm.slane %v381, 0
  %v385 = vadd.f32 %v379, %v383
  %v386 = vmax.f32 %v385, 0.0
  %v387 = vld [vmem:[%s5] sm:$0xff]
  %v388 = vld [vmem:[%s5 + $0x8] sm:$0xff]
  %v389 = vld [vmem:[%s5 + $0x10] sm:$0xff]
  %v390 = vld [vmem:[%s5 + $0x18] sm:$0xff]
  %v391 = vld [vmem:[%s6] sm:$0x1]
  %v393 = vperm.slane %v391, 0
  %vm395 = vcmask 261120
  %v397 = vsel %vm395, %v386, 0
  %399 = vmatpush.msra.mxu0 0.0
  %400 = vmatpush.msra.mxu0 0.0
  %401 = vmatpush.msra.mxu0 0.0
  %402 = vmatpush.msra.mxu0 0.0
  %403 = vmatpush.msra.mxu0 0.0
  %404 = vmatpush.msra.mxu0 0.0
  %405 = vmatpush.msra.mxu0 0.0
  %406 = vmatpush.msra.mxu0 0.0
  %407 = vmatpush.msra.mxu0 0.0
  %408 = vmatpush.msra.mxu0 0.0
  %409 = vmatpush.msra.mxu0 0.0
  %410 = vmatpush.msra.mxu0 0.0
  %411 = vmatpush.msra.mxu0 %v390
  %412 = vmatpush.msra.mxu0 %v389
  %413 = vmatpush.msra.mxu0 %v388
  %414 = vmatpush.msra.mxu0 %v387
  %415 = vmatmul.f32.gmra.mxu0 %v397
  %v416 = vpop.f32.mrf.mxu0
  %v417 = vadd.f32 %v393, %v416
  %418 = vdwg.mxu0
  %v419 = vmax.f32 %v417, 0.0
  %v420 = vld [vmem:[%s7] sm:$0xff]
  %v421 = vld [vmem:[%s7 + $0x8] sm:$0xff]
  %v422 = vld [vmem:[%s7 + $0x10] sm:$0xff]
  %v423 = vld [vmem:[%s7 + $0x18] sm:$0xff]
  %v424 = vld [vmem:[%s8] sm:$0x1]
  %v426 = vperm.slane %v424, 0
  %v429 = vsel %vm395, %v419, 0
  %431 = vmatpush.msra.mxu0 0.0
  %432 = vmatpush.msra.mxu0 0.0
  %433 = vmatpush.msra.mxu0 0.0
  %434 = vmatpush.msra.mxu0 0.0
  %435 = vmatpush.msra.mxu0 0.0
  %436 = vmatpush.msra.mxu0 0.0
  %437 = vmatpush.msra.mxu0 0.0
  %438 = vmatpush.msra.mxu0 0.0
  %439 = vmatpush.msra.mxu0 0.0
  %440 = vmatpush.msra.mxu0 0.0
  %441 = vmatpush.msra.mxu0 0.0
  %442 = vmatpush.msra.mxu0 0.0
  %443 = vmatpush.msra.mxu0 %v423
  %444 = vmatpush.msra.mxu0 %v422
  %445 = vmatpush.msra.mxu0 %v421
  %446 = vmatpush.msra.mxu0 %v420
  %447 = vmatmul.f32.gmra.mxu0 %v429
  %v448 = vpop.f32.mrf.mxu0
  %v449 = vadd.f32 %v426, %v448
  %450 = vdwg.mxu0
  %451 = vst [vmem:[%s9] sm:$0x3] %v449
  // Predicated region
  $region38: #{encoder_forward.1} parent=0 // pred_check
    _
  $region39: #{encoder_forward.1} parent=0 // pred_check_branch
    %453 = sbr.rel (0) target = $region41
  $region40: #{encoder_forward.1} parent=0 // pred_region
    _
  $region41: #{encoder_forward.1} parent=0 // pred_fallthru
    _
  // Predicated region
  $region42: #{encoder_forward.1} parent=0 // pred_check
    _
  $region43: #{encoder_forward.1} parent=0 // pred_check_branch
    %455 = sbr.rel (0) target = $region45
  $region44: #{encoder_forward.1} parent=0 // pred_region
    _
  $region45: #{encoder_forward.1} parent=0 // pred_fallthru
    _

</llo_original>
